<compile_context>
chip_gen: v7x
topology: tpu7x:2x2x1
jax: 0.10.0
libtpu: 0.0.40
codegen_flags: <defaults>
</compile_context>

<pallas_src>
import jax
import jax.numpy as jnp
from jax.experimental import pallas as pl
from jax.experimental.pallas import tpu as pltpu

K = 5  # conv kernel size


def conv5x5_kernel(w_ref, b_ref, x_ref, o_ref):
    """w_ref: (25,) SMEM, b_ref: (1,) SMEM, x_ref: (bB,H,W) VMEM, o_ref: (bB,OH,OW) VMEM."""
    bB, OH, OW = o_ref.shape

    # Hoist all 25 scalar weight reads (sld) out of the hot accumulate loop.
    w = [w_ref[k] for k in range(K * K)]

    # Fold the bias into the accumulator init instead of a final vadd pass.
    acc = jnp.full((bB, OH, OW), b_ref[0], dtype=jnp.float32)

    # 5 lane-offset shifts (one per dj) instead of 25: the dj slice is the
    # cross-lane (expensive) part; the di offset is a cheap sublane slice of the
    # already-shifted slab.
    for dj in range(K):
        x_dj = x_ref[:, :, dj:dj + OW]            # (bB, H, OW) — one lane shift
        for di in range(K):
            acc = acc + w[di * K + dj] * x_dj[:, di:di + OH, :]

    o_ref[...] = acc


def pixel_condition_encoder(x_nchw, weight, bias):
    """Forward pass matching the PyTorch module.

    x_nchw : (B, 1, H, W) float32
    weight : (1, 1, 5, 5) float32
    bias   : (1,) float32
    returns: (B, (H-4)*(W-4)) float32
    """
    B, C, H, W = x_nchw.shape
    assert C == 1, "PixelConditionEncoder expects a single input channel"
    OH, OW = H - K + 1, W - K + 1

    x = x_nchw[:, 0]                 # (B, H, W) — channel (==1) squeezed; glue only
    w_flat = weight.reshape(-1)      # (25,) 1-D SMEM: avoids 2-D SMEM [8,128] padding

    # Batch tile size: keep double-buffered (input tile + output tile) under a
    # ~40 MiB data budget so it fits v7x's 64 MiB physical VMEM with headroom
    # (also fine on v5e/v6e which have 128 MiB).
    bytes_per_image = (H * W + OH * OW) * 4           # f32 in + out per image
    vmem_data_budget = 40 * 1024 * 1024
    bB = max(1, min(B, vmem_data_budget // (2 * bytes_per_image)))
    grid = (pl.cdiv(B, bB),)

    needed = 2 * bB * bytes_per_image                 # double-buffered in + out tiles
    vmem_limit = int(min(48 * 1024 * 1024,
                         max(16 * 1024 * 1024, needed + 8 * 1024 * 1024)))

    out = pl.pallas_call(
        conv5x5_kernel,
        out_shape=jax.ShapeDtypeStruct((B, OH, OW), jnp.float32),
        grid=grid,
        in_specs=[
            pl.BlockSpec(memory_space=pltpu.MemorySpace.SMEM),       # weights (25,)
            pl.BlockSpec(memory_space=pltpu.MemorySpace.SMEM),       # bias (1,)
            pl.BlockSpec((bB, H, W), lambda b: (b, 0, 0)),           # image batch tile
        ],
        out_specs=pl.BlockSpec((bB, OH, OW), lambda b: (b, 0, 0)),
        compiler_params=pltpu.CompilerParams(
            dimension_semantics=("parallel",),
            vmem_limit_bytes=vmem_limit,
        ),
    )(w_flat, bias, x)

    # .view(B, -1): collapsing trailing dims of a row-major HBM array is a
    # metadata-only reshape (XLA bitcast) — no relayout copy.
    # TODO(synk): for production shapes this tiny (288 outputs/image), fuse this op
    # with the surrounding network stage rather than paying per-call launch overhead.
    return out.reshape(B, OH * OW)


def _reference(x_nchw, weight, bias):
    """Pure-JAX reference (lax conv) for correctness check."""
    out = jax.lax.conv_general_dilated(
        x_nchw, weight, window_strides=(1, 1), padding="VALID",
        dimension_numbers=("NCHW", "OIHW", "NCHW"))
    out = out + bias.reshape(1, -1, 1, 1)
    return out.reshape(out.shape[0], -1)


if __name__ == "__main__":
    key = jax.random.PRNGKey(0)
    k_x, k_w, k_b = jax.random.split(key, 3)

    # Small shapes consistent with the module: (B=2, C=1, H=16, W=16)
    B, C, H, W = 2, 1, 16, 16
    x = jax.random.normal(k_x, (B, C, H, W), dtype=jnp.float32)

    # Deterministic parameter init mimicking PyTorch Conv2d default:
    # uniform(-1/sqrt(fan_in), 1/sqrt(fan_in)), fan_in = 1*5*5 = 25
    bound = 1.0 / (C * K * K) ** 0.5
    weight = jax.random.uniform(k_w, (1, 1, K, K), jnp.float32, -bound, bound)
    bias = jax.random.uniform(k_b, (1,), jnp.float32, -bound, bound)

    y = pixel_condition_encoder(x, weight, bias)
    y = jax.block_until_ready(y)

    y_ref = _reference(x, weight, bias)
    assert y.shape == (B, (H - K + 1) * (W - K + 1)), y.shape
    assert jnp.allclose(y, y_ref, atol=1e-5, rtol=1e-5), "mismatch vs reference"

    print("KERNEL_OK")
</pallas_src>

<mosaic_0001>
module attributes {stable_mosaic.version = 11 : i64} {
  func.func @conv5x5_kernel(%arg0: i32, %arg1: memref<25xf32, #tpu.memory_space<smem>>, %arg2: memref<1xf32, #tpu.memory_space<smem>>, %arg3: memref<2x16x16xf32, #tpu.memory_space<vmem>>, %arg4: memref<2x12x12xf32, #tpu.memory_space<vmem>>) attributes {dimension_semantics = [#tpu.dimension_semantics<parallel>], iteration_bounds = array<i64: 1>, scalar_prefetch = 0 : i64, scratch_operands = 0 : i64, tpu.core_type = #tpu.core_type<tc>, window_params = [{transform_indices = @transform_0, window_bounds = array<i64: 25>}, {transform_indices = @transform_1, window_bounds = array<i64: 1>}, {transform_indices = @transform_2, window_bounds = array<i64: 2, 16, 16>}, {transform_indices = @transform_3, window_bounds = array<i64: 2, 12, 12>}]} {
    %c0 = arith.constant 0 : index
    %0 = memref.load %arg1[%c0] : memref<25xf32, #tpu.memory_space<smem>>
    %c1 = arith.constant 1 : index
    %1 = memref.load %arg1[%c1] : memref<25xf32, #tpu.memory_space<smem>>
    %c2 = arith.constant 2 : index
    %2 = memref.load %arg1[%c2] : memref<25xf32, #tpu.memory_space<smem>>
    %c3 = arith.constant 3 : index
    %3 = memref.load %arg1[%c3] : memref<25xf32, #tpu.memory_space<smem>>
    %c4 = arith.constant 4 : index
    %4 = memref.load %arg1[%c4] : memref<25xf32, #tpu.memory_space<smem>>
    %c5 = arith.constant 5 : index
    %5 = memref.load %arg1[%c5] : memref<25xf32, #tpu.memory_space<smem>>
    %c6 = arith.constant 6 : index
    %6 = memref.load %arg1[%c6] : memref<25xf32, #tpu.memory_space<smem>>
    %c7 = arith.constant 7 : index
    %7 = memref.load %arg1[%c7] : memref<25xf32, #tpu.memory_space<smem>>
    %c8 = arith.constant 8 : index
    %8 = memref.load %arg1[%c8] : memref<25xf32, #tpu.memory_space<smem>>
    %c9 = arith.constant 9 : index
    %9 = memref.load %arg1[%c9] : memref<25xf32, #tpu.memory_space<smem>>
    %c10 = arith.constant 10 : index
    %10 = memref.load %arg1[%c10] : memref<25xf32, #tpu.memory_space<smem>>
    %c11 = arith.constant 11 : index
    %11 = memref.load %arg1[%c11] : memref<25xf32, #tpu.memory_space<smem>>
    %c12 = arith.constant 12 : index
    %12 = memref.load %arg1[%c12] : memref<25xf32, #tpu.memory_space<smem>>
    %c13 = arith.constant 13 : index
    %13 = memref.load %arg1[%c13] : memref<25xf32, #tpu.memory_space<smem>>
    %c14 = arith.constant 14 : index
    %14 = memref.load %arg1[%c14] : memref<25xf32, #tpu.memory_space<smem>>
    %c15 = arith.constant 15 : index
    %15 = memref.load %arg1[%c15] : memref<25xf32, #tpu.memory_space<smem>>
    %c16 = arith.constant 16 : index
    %16 = memref.load %arg1[%c16] : memref<25xf32, #tpu.memory_space<smem>>
    %c17 = arith.constant 17 : index
    %17 = memref.load %arg1[%c17] : memref<25xf32, #tpu.memory_space<smem>>
    %c18 = arith.constant 18 : index
    %18 = memref.load %arg1[%c18] : memref<25xf32, #tpu.memory_space<smem>>
    %c19 = arith.constant 19 : index
    %19 = memref.load %arg1[%c19] : memref<25xf32, #tpu.memory_space<smem>>
    %c20 = arith.constant 20 : index
    %20 = memref.load %arg1[%c20] : memref<25xf32, #tpu.memory_space<smem>>
    %c21 = arith.constant 21 : index
    %21 = memref.load %arg1[%c21] : memref<25xf32, #tpu.memory_space<smem>>
    %c22 = arith.constant 22 : index
    %22 = memref.load %arg1[%c22] : memref<25xf32, #tpu.memory_space<smem>>
    %c23 = arith.constant 23 : index
    %23 = memref.load %arg1[%c23] : memref<25xf32, #tpu.memory_space<smem>>
    %c24 = arith.constant 24 : index
    %24 = memref.load %arg1[%c24] : memref<25xf32, #tpu.memory_space<smem>>
    %c0_0 = arith.constant 0 : index
    %25 = memref.load %arg2[%c0_0] : memref<1xf32, #tpu.memory_space<smem>>
    %26 = vector.broadcast %25 : f32 to vector<2x12x12xf32>
    %c0_1 = arith.constant 0 : index
    %c0_2 = arith.constant 0 : index
    %c0_3 = arith.constant 0 : index
    %27 = vector.load %arg3[%c0_1, %c0_2, %c0_3] : memref<2x16x16xf32, #tpu.memory_space<vmem>>, vector<2x16x12xf32>
    %28 = vector.extract_strided_slice %27 {offsets = [0, 0, 0], sizes = [2, 12, 12], strides = [1, 1, 1]} : vector<2x16x12xf32> to vector<2x12x12xf32>
    %29 = vector.broadcast %0 : f32 to vector<2x12x12xf32>
    %30 = arith.mulf %29, %28 : vector<2x12x12xf32>
    %31 = arith.addf %26, %30 : vector<2x12x12xf32>
    %32 = vector.extract_strided_slice %27 {offsets = [0, 1, 0], sizes = [2, 12, 12], strides = [1, 1, 1]} : vector<2x16x12xf32> to vector<2x12x12xf32>
    %33 = vector.broadcast %5 : f32 to vector<2x12x12xf32>
    %34 = arith.mulf %33, %32 : vector<2x12x12xf32>
    %35 = arith.addf %31, %34 : vector<2x12x12xf32>
    %36 = vector.extract_strided_slice %27 {offsets = [0, 2, 0], sizes = [2, 12, 12], strides = [1, 1, 1]} : vector<2x16x12xf32> to vector<2x12x12xf32>
    %37 = vector.broadcast %10 : f32 to vector<2x12x12xf32>
    %38 = arith.mulf %37, %36 : vector<2x12x12xf32>
    %39 = arith.addf %35, %38 : vector<2x12x12xf32>
    %40 = vector.extract_strided_slice %27 {offsets = [0, 3, 0], sizes = [2, 12, 12], strides = [1, 1, 1]} : vector<2x16x12xf32> to vector<2x12x12xf32>
    %41 = vector.broadcast %15 : f32 to vector<2x12x12xf32>
    %42 = arith.mulf %41, %40 : vector<2x12x12xf32>
    %43 = arith.addf %39, %42 : vector<2x12x12xf32>
    %44 = vector.extract_strided_slice %27 {offsets = [0, 4, 0], sizes = [2, 12, 12], strides = [1, 1, 1]} : vector<2x16x12xf32> to vector<2x12x12xf32>
    %45 = vector.broadcast %20 : f32 to vector<2x12x12xf32>
    %46 = arith.mulf %45, %44 : vector<2x12x12xf32>
    %47 = arith.addf %43, %46 : vector<2x12x12xf32>
    %c0_4 = arith.constant 0 : index
    %c0_5 = arith.constant 0 : index
    %c1_6 = arith.constant 1 : index
    %48 = vector.load %arg3[%c0_4, %c0_5, %c1_6] : memref<2x16x16xf32, #tpu.memory_space<vmem>>, vector<2x16x12xf32>
    %49 = vector.extract_strided_slice %48 {offsets = [0, 0, 0], sizes = [2, 12, 12], strides = [1, 1, 1]} : vector<2x16x12xf32> to vector<2x12x12xf32>
    %50 = vector.broadcast %1 : f32 to vector<2x12x12xf32>
    %51 = arith.mulf %50, %49 : vector<2x12x12xf32>
    %52 = arith.addf %47, %51 : vector<2x12x12xf32>
    %53 = vector.extract_strided_slice %48 {offsets = [0, 1, 0], sizes = [2, 12, 12], strides = [1, 1, 1]} : vector<2x16x12xf32> to vector<2x12x12xf32>
    %54 = vector.broadcast %6 : f32 to vector<2x12x12xf32>
    %55 = arith.mulf %54, %53 : vector<2x12x12xf32>
    %56 = arith.addf %52, %55 : vector<2x12x12xf32>
    %57 = vector.extract_strided_slice %48 {offsets = [0, 2, 0], sizes = [2, 12, 12], strides = [1, 1, 1]} : vector<2x16x12xf32> to vector<2x12x12xf32>
    %58 = vector.broadcast %11 : f32 to vector<2x12x12xf32>
    %59 = arith.mulf %58, %57 : vector<2x12x12xf32>
    %60 = arith.addf %56, %59 : vector<2x12x12xf32>
    %61 = vector.extract_strided_slice %48 {offsets = [0, 3, 0], sizes = [2, 12, 12], strides = [1, 1, 1]} : vector<2x16x12xf32> to vector<2x12x12xf32>
    %62 = vector.broadcast %16 : f32 to vector<2x12x12xf32>
    %63 = arith.mulf %62, %61 : vector<2x12x12xf32>
    %64 = arith.addf %60, %63 : vector<2x12x12xf32>
    %65 = vector.extract_strided_slice %48 {offsets = [0, 4, 0], sizes = [2, 12, 12], strides = [1, 1, 1]} : vector<2x16x12xf32> to vector<2x12x12xf32>
    %66 = vector.broadcast %21 : f32 to vector<2x12x12xf32>
    %67 = arith.mulf %66, %65 : vector<2x12x12xf32>
    %68 = arith.addf %64, %67 : vector<2x12x12xf32>
    %c0_7 = arith.constant 0 : index
    %c0_8 = arith.constant 0 : index
    %c2_9 = arith.constant 2 : index
    %69 = vector.load %arg3[%c0_7, %c0_8, %c2_9] : memref<2x16x16xf32, #tpu.memory_space<vmem>>, vector<2x16x12xf32>
    %70 = vector.extract_strided_slice %69 {offsets = [0, 0, 0], sizes = [2, 12, 12], strides = [1, 1, 1]} : vector<2x16x12xf32> to vector<2x12x12xf32>
    %71 = vector.broadcast %2 : f32 to vector<2x12x12xf32>
    %72 = arith.mulf %71, %70 : vector<2x12x12xf32>
    %73 = arith.addf %68, %72 : vector<2x12x12xf32>
    %74 = vector.extract_strided_slice %69 {offsets = [0, 1, 0], sizes = [2, 12, 12], strides = [1, 1, 1]} : vector<2x16x12xf32> to vector<2x12x12xf32>
    %75 = vector.broadcast %7 : f32 to vector<2x12x12xf32>
    %76 = arith.mulf %75, %74 : vector<2x12x12xf32>
    %77 = arith.addf %73, %76 : vector<2x12x12xf32>
    %78 = vector.extract_strided_slice %69 {offsets = [0, 2, 0], sizes = [2, 12, 12], strides = [1, 1, 1]} : vector<2x16x12xf32> to vector<2x12x12xf32>
    %79 = vector.broadcast %12 : f32 to vector<2x12x12xf32>
    %80 = arith.mulf %79, %78 : vector<2x12x12xf32>
    %81 = arith.addf %77, %80 : vector<2x12x12xf32>
    %82 = vector.extract_strided_slice %69 {offsets = [0, 3, 0], sizes = [2, 12, 12], strides = [1, 1, 1]} : vector<2x16x12xf32> to vector<2x12x12xf32>
    %83 = vector.broadcast %17 : f32 to vector<2x12x12xf32>
    %84 = arith.mulf %83, %82 : vector<2x12x12xf32>
    %85 = arith.addf %81, %84 : vector<2x12x12xf32>
    %86 = vector.extract_strided_slice %69 {offsets = [0, 4, 0], sizes = [2, 12, 12], strides = [1, 1, 1]} : vector<2x16x12xf32> to vector<2x12x12xf32>
    %87 = vector.broadcast %22 : f32 to vector<2x12x12xf32>
    %88 = arith.mulf %87, %86 : vector<2x12x12xf32>
    %89 = arith.addf %85, %88 : vector<2x12x12xf32>
    %c0_10 = arith.constant 0 : index
    %c0_11 = arith.constant 0 : index
    %c3_12 = arith.constant 3 : index
    %90 = vector.load %arg3[%c0_10, %c0_11, %c3_12] : memref<2x16x16xf32, #tpu.memory_space<vmem>>, vector<2x16x12xf32>
    %91 = vector.extract_strided_slice %90 {offsets = [0, 0, 0], sizes = [2, 12, 12], strides = [1, 1, 1]} : vector<2x16x12xf32> to vector<2x12x12xf32>
    %92 = vector.broadcast %3 : f32 to vector<2x12x12xf32>
    %93 = arith.mulf %92, %91 : vector<2x12x12xf32>
    %94 = arith.addf %89, %93 : vector<2x12x12xf32>
    %95 = vector.extract_strided_slice %90 {offsets = [0, 1, 0], sizes = [2, 12, 12], strides = [1, 1, 1]} : vector<2x16x12xf32> to vector<2x12x12xf32>
    %96 = vector.broadcast %8 : f32 to vector<2x12x12xf32>
    %97 = arith.mulf %96, %95 : vector<2x12x12xf32>
    %98 = arith.addf %94, %97 : vector<2x12x12xf32>
    %99 = vector.extract_strided_slice %90 {offsets = [0, 2, 0], sizes = [2, 12, 12], strides = [1, 1, 1]} : vector<2x16x12xf32> to vector<2x12x12xf32>
    %100 = vector.broadcast %13 : f32 to vector<2x12x12xf32>
    %101 = arith.mulf %100, %99 : vector<2x12x12xf32>
    %102 = arith.addf %98, %101 : vector<2x12x12xf32>
    %103 = vector.extract_strided_slice %90 {offsets = [0, 3, 0], sizes = [2, 12, 12], strides = [1, 1, 1]} : vector<2x16x12xf32> to vector<2x12x12xf32>
    %104 = vector.broadcast %18 : f32 to vector<2x12x12xf32>
    %105 = arith.mulf %104, %103 : vector<2x12x12xf32>
    %106 = arith.addf %102, %105 : vector<2x12x12xf32>
    %107 = vector.extract_strided_slice %90 {offsets = [0, 4, 0], sizes = [2, 12, 12], strides = [1, 1, 1]} : vector<2x16x12xf32> to vector<2x12x12xf32>
    %108 = vector.broadcast %23 : f32 to vector<2x12x12xf32>
    %109 = arith.mulf %108, %107 : vector<2x12x12xf32>
    %110 = arith.addf %106, %109 : vector<2x12x12xf32>
    %c0_13 = arith.constant 0 : index
    %c0_14 = arith.constant 0 : index
    %c4_15 = arith.constant 4 : index
    %111 = vector.load %arg3[%c0_13, %c0_14, %c4_15] : memref<2x16x16xf32, #tpu.memory_space<vmem>>, vector<2x16x12xf32>
    %112 = vector.extract_strided_slice %111 {offsets = [0, 0, 0], sizes = [2, 12, 12], strides = [1, 1, 1]} : vector<2x16x12xf32> to vector<2x12x12xf32>
    %113 = vector.broadcast %4 : f32 to vector<2x12x12xf32>
    %114 = arith.mulf %113, %112 : vector<2x12x12xf32>
    %115 = arith.addf %110, %114 : vector<2x12x12xf32>
    %116 = vector.extract_strided_slice %111 {offsets = [0, 1, 0], sizes = [2, 12, 12], strides = [1, 1, 1]} : vector<2x16x12xf32> to vector<2x12x12xf32>
    %117 = vector.broadcast %9 : f32 to vector<2x12x12xf32>
    %118 = arith.mulf %117, %116 : vector<2x12x12xf32>
    %119 = arith.addf %115, %118 : vector<2x12x12xf32>
    %120 = vector.extract_strided_slice %111 {offsets = [0, 2, 0], sizes = [2, 12, 12], strides = [1, 1, 1]} : vector<2x16x12xf32> to vector<2x12x12xf32>
    %121 = vector.broadcast %14 : f32 to vector<2x12x12xf32>
    %122 = arith.mulf %121, %120 : vector<2x12x12xf32>
    %123 = arith.addf %119, %122 : vector<2x12x12xf32>
    %124 = vector.extract_strided_slice %111 {offsets = [0, 3, 0], sizes = [2, 12, 12], strides = [1, 1, 1]} : vector<2x16x12xf32> to vector<2x12x12xf32>
    %125 = vector.broadcast %19 : f32 to vector<2x12x12xf32>
    %126 = arith.mulf %125, %124 : vector<2x12x12xf32>
    %127 = arith.addf %123, %126 : vector<2x12x12xf32>
    %128 = vector.extract_strided_slice %111 {offsets = [0, 4, 0], sizes = [2, 12, 12], strides = [1, 1, 1]} : vector<2x16x12xf32> to vector<2x12x12xf32>
    %129 = vector.broadcast %24 : f32 to vector<2x12x12xf32>
    %130 = arith.mulf %129, %128 : vector<2x12x12xf32>
    %131 = arith.addf %127, %130 : vector<2x12x12xf32>
    %c0_16 = arith.constant 0 : index
    %c0_17 = arith.constant 0 : index
    %c0_18 = arith.constant 0 : index
    %132 = vector.load %arg4[%c0_16, %c0_17, %c0_18] : memref<2x12x12xf32, #tpu.memory_space<vmem>>, vector<2x12x12xf32>
    tpu.vector_store %arg4[%c0_16, %c0_17, %c0_18], %131 {strides = array<i32>} : memref<2x12x12xf32, #tpu.memory_space<vmem>>, vector<2x12x12xf32>,
    return
  }
  func.func @transform_0(%arg0: i32) -> i32 {
    %c0_i32 = arith.constant 0 : i32
    %c0_i32_0 = arith.constant 0 : i32
    return %c0_i32 : i32
  }
  func.func @transform_1(%arg0: i32) -> i32 {
    %c0_i32 = arith.constant 0 : i32
    %c0_i32_0 = arith.constant 0 : i32
    return %c0_i32 : i32
  }
  func.func @transform_2(%arg0: i32) -> (i32, i32, i32) {
    %c0_i32 = arith.constant 0 : i32
    %c0_i32_0 = arith.constant 0 : i32
    %c0_i32_1 = arith.constant 0 : i32
    return %arg0, %c0_i32, %c0_i32_0 : i32, i32, i32
  }
  func.func @transform_3(%arg0: i32) -> (i32, i32, i32) {
    %c0_i32 = arith.constant 0 : i32
    %c0_i32_0 = arith.constant 0 : i32
    %c0_i32_1 = arith.constant 0 : i32
    return %arg0, %c0_i32, %c0_i32_0 : i32, i32, i32
  }
}

</mosaic_0001>

<llo_original>
// kernel: tpu_custom_call.1
$region0: #{tpu_custom_call.1}
  #allocation0 [shape = 'u32[]', space=smem, size = 0x4, offset = 0x4, fixed_abs, tag = 'smem constant byte address 0x4 - core index']
  #allocation1 [shape = 'u32[144,128]{1,0:T(1,128)}', space=vmem, size = 0x12000, scoped, tag = 'internal scratch']
  #allocation2 [shape = 'f32[1]{0:T(128)S(6)}', space=smem, size = 0x200, scoped, tag = 'scoped memory for tpu_custom_call.1']
  %s0 = inlined_call_operand.vmem [shape: f32[25], index: 0, kind: input, shape index: {}]
  %s1 = inlined_call_operand.<no memory space> [shape: f32[1], index: 1, kind: input, shape index: {}]
  %s2 = inlined_call_operand.hbm [shape: f32[2,16,16], index: 2, kind: input, shape index: {}]
  %s3 = inlined_call_operand.vmem [shape: f32[2,12,12], index: 3, kind: output, shape index: {}]
  %s4 = sld [smem:[#allocation0]]
  $region30: #{tpu_custom_call.1} parent=0
    _
  %s6 = ssub.s32 1, %s4
  %s7 = scalar_select 0, %s6, %s4
  %8 = sst [smem:[#allocation2]] %s1
  $region1: #{tpu_custom_call.1} parent=0
    #allocation3 [shape = 'u8[512]{0}', space=smem, size = 0x200, scoped, tag = 'input window, operand 0, single buffered']
    #allocation4 [shape = 's32[1]{0}', space=sflag, size = 0x4, scoped, tag = 'scoped memory for tpu_custom_call.1']
    #allocation5 [shape = 's32[1]{0}', space=sflag, size = 0x4, scoped, tag = 'scoped memory for tpu_custom_call.1']
    #allocation6 [shape = 'u8[16384]{0}', space=vmem, size = 0x4000, scoped, tag = 'input window, operand 2, single buffered']
    %9 = vsyncpa [#allocation5], 0
    %10 = vsyncpa [#allocation4], 0
    // Predicated region
    $region2: #{tpu_custom_call.1} parent=1 // pred_check
      _
    $region3: #{tpu_custom_call.1} parent=1 // pred_check_branch
      %12 = sbr.rel (0) target = $region5
    $region4: #{tpu_custom_call.1} parent=1 // pred_region
      %s14 = ssub.s32 16, 16
      %15 = vsyncadd [#allocation5], %s14
      %s17 = sshll.u32 %s0, 4
      %s18 = int_to_ptr.vmem [resolvable:$true] %s17
      %20 = dma.vmem_to_smem %s18, 16, [#allocation3], [#allocation5]
    $region5: #{tpu_custom_call.1} parent=1 // pred_fallthru
      _
    // Predicated region
    $region6: #{tpu_custom_call.1} parent=1 // pred_check
      _
    $region7: #{tpu_custom_call.1} parent=1 // pred_check_branch
      %22 = sbr.rel (0) target = $region9
    $region8: #{tpu_custom_call.1} parent=1 // pred_region
      _
    $region9: #{tpu_custom_call.1} parent=1 // pred_fallthru
      _
    // Predicated region
    $region10: #{tpu_custom_call.1} parent=1 // pred_check
      _
    $region11: #{tpu_custom_call.1} parent=1 // pred_check_branch
      %24 = sbr.rel (0) target = $region13
    $region12: #{tpu_custom_call.1} parent=1 // pred_region
      %s26 = ssub.s32 512, 512
      %27 = vsyncadd [#allocation4], %s26
      %s28 = sshll.u32 [#allocation6], 4
      %s29 = int_to_ptr.vmem [resolvable:$true] %s28
      %34 = dma.hbm_to_vmem [thread:$0]  %s2, 512, %s29, [#allocation4], 128, 128, 8
    $region13: #{tpu_custom_call.1} parent=1 // pred_fallthru
      _
    // Predicated region
    $region14: #{tpu_custom_call.1} parent=1 // pred_check
      _
    $region15: #{tpu_custom_call.1} parent=1 // pred_check_branch
      %36 = sbr.rel (0) target = $region17
    $region16: #{tpu_custom_call.1} parent=1 // pred_region
      %37 = dma.done [#allocation5], 16
    $region17: #{tpu_custom_call.1} parent=1 // pred_fallthru
      _
    // Predicated region
    $region18: #{tpu_custom_call.1} parent=1 // pred_check
      _
    $region19: #{tpu_custom_call.1} parent=1 // pred_check_branch
      %39 = sbr.rel (0) target = $region21
    $region20: #{tpu_custom_call.1} parent=1 // pred_region
      %40 = dma.done [#allocation4], 512
    $region21: #{tpu_custom_call.1} parent=1 // pred_fallthru
      _
    %41 = sfence
    %s42 = sld [smem:[#allocation3]]
    %s43 = sld [smem:[#allocation3 + $0x1]]
    %s44 = sld [smem:[#allocation3 + $0x2]]
    %s45 = sld [smem:[#allocation3 + $0x3]]
    %s46 = sld [smem:[#allocation3 + $0x4]]
    %s47 = sld [smem:[#allocation3 + $0x5]]
    %s48 = sld [smem:[#allocation3 + $0x6]]
    %s49 = sld [smem:[#allocation3 + $0x7]]
    %s50 = sld [smem:[#allocation3 + $0x8]]
    %s51 = sld [smem:[#allocation3 + $0x9]]
    %s52 = sld [smem:[#allocation3 + $0xa]]
    %s53 = sld [smem:[#allocation3 + $0xb]]
    %s54 = sld [smem:[#allocation3 + $0xc]]
    %s55 = sld [smem:[#allocation3 + $0xd]]
    %s56 = sld [smem:[#allocation3 + $0xe]]
    %s57 = sld [smem:[#allocation3 + $0xf]]
    %s58 = sld [smem:[#allocation3 + $0x10]]
    %s59 = sld [smem:[#allocation3 + $0x11]]
    %s60 = sld [smem:[#allocation3 + $0x12]]
    %s61 = sld [smem:[#allocation3 + $0x13]]
    %s62 = sld [smem:[#allocation3 + $0x14]]
    %s63 = sld [smem:[#allocation3 + $0x15]]
    %s64 = sld [smem:[#allocation3 + $0x16]]
    %s65 = sld [smem:[#allocation3 + $0x17]]
    %s66 = sld [smem:[#allocation3 + $0x18]]
    %s67 = sld [smem:[#allocation2]]
    %v68 = vstv %s67
    %v69 = vld [vmem:[#allocation6] sm:$0xff]
    %v70 = vld [vmem:[#allocation6 + $0x8] sm:$0xff]
    %v71 = vld [vmem:[#allocation6 + $0x10] sm:$0xff]
    %v72 = vld [vmem:[#allocation6 + $0x18] sm:$0xff]
    %v73 = vstv %s42
    %v74 = vmul.f32 %v73, %v69
    %v75 = vmul.f32 %v73, %v70
    %v76 = vmul.f32 %v73, %v71
    %v77 = vmul.f32 %v73, %v72
    %v78 = vadd.f32 %v68, %v74
    %v79 = vadd.f32 %v68, %v75
    %v80 = vadd.f32 %v68, %v76
    %v81 = vadd.f32 %v68, %v77
    %v82 = vstv %s47
    %v83 = vmul.f32 %v82, %v69
    %v84 = vmul.f32 %v82, %v70
    %v85 = vmul.f32 %v82, %v71
    %v86 = vmul.f32 %v82, %v72
    %vm91 = vcmask 1046528
    %v92 = vrot.slane %v83, 1
    %v93 = vrot.slane %v84, 1
    %v94 = vsel %vm91, %v92, %v93
    %v95 = vrot.slane %v85, 1
    %v96 = vrot.slane %v86, 1
    %v97 = vsel %vm91, %v95, %v96
    %v102 = vadd.f32 %v78, %v94
    %v103 = vadd.f32 %v79, %v93
    %v104 = vadd.f32 %v80, %v97
    %v105 = vadd.f32 %v81, %v96
    %v106 = vstv %s52
    %v107 = vmul.f32 %v106, %v69
    %v108 = vmul.f32 %v106, %v70
    %v109 = vmul.f32 %v106, %v71
    %v110 = vmul.f32 %v106, %v72
    %vm115 = vcmask 1045504
    %v116 = vrot.slane %v107, 2
    %v117 = vrot.slane %v108, 2
    %v118 = vsel %vm115, %v116, %v117
    %v119 = vrot.slane %v109, 2
    %v120 = vrot.slane %v110, 2
    %v121 = vsel %vm115, %v119, %v120
    %v126 = vadd.f32 %v102, %v118
    %v127 = vadd.f32 %v103, %v117
    %v128 = vadd.f32 %v104, %v121
    %v129 = vadd.f32 %v105, %v120
    %v130 = vstv %s57
    %v131 = vmul.f32 %v130, %v69
    %v132 = vmul.f32 %v130, %v70
    %v133 = vmul.f32 %v130, %v71
    %v134 = vmul.f32 %v130, %v72
    %vm139 = vcmask 1044480
    %v140 = vrot.slane %v131, 3
    %v141 = vrot.slane %v132, 3
    %v142 = vsel %vm139, %v140, %v141
    %v143 = vrot.slane %v133, 3
    %v144 = vrot.slane %v134, 3
    %v145 = vsel %vm139, %v143, %v144
    %v150 = vadd.f32 %v126, %v142
    %v151 = vadd.f32 %v127, %v141
    %v152 = vadd.f32 %v128, %v145
    %v153 = vadd.f32 %v129, %v144
    %v154 = vstv %s62
    %v155 = vmul.f32 %v154, %v69
    %v156 = vmul.f32 %v154, %v70
    %v157 = vmul.f32 %v154, %v71
    %v158 = vmul.f32 %v154, %v72
    %vm163 = vcmask 1043456
    %v164 = vrot.slane %v155, 4
    %v165 = vrot.slane %v156, 4
    %v166 = vsel %vm163, %v164, %v165
    %v167 = vrot.slane %v157, 4
    %v168 = vrot.slane %v158, 4
    %v169 = vsel %vm163, %v167, %v168
    %v174 = vadd.f32 %v150, %v166
    %v175 = vadd.f32 %v151, %v165
    %v176 = vadd.f32 %v152, %v169
    %v177 = vadd.f32 %v153, %v168
    %v178 = vstv %s43
    %v179 = vmul.f32 %v178, %v69
    %v180 = vmul.f32 %v178, %v70
    %v181 = vmul.f32 %v178, %v71
    %v182 = vmul.f32 %v178, %v72
    %187 = vrot.lane.b32.xlu0 %v179, 127
    %v188 = vpop.permute.xlu0 %187
    %189 = vrot.lane.b32.xlu0 %v180, 127
    %v190 = vpop.permute.xlu0 %189
    %191 = vrot.lane.b32.xlu0 %v181, 127
    %v192 = vpop.permute.xlu0 %191
    %193 = vrot.lane.b32.xlu0 %v182, 127
    %v194 = vpop.permute.xlu0 %193
    %v199 = vadd.f32 %v174, %v188
    %v200 = vadd.f32 %v175, %v190
    %v201 = vadd.f32 %v176, %v192
    %v202 = vadd.f32 %v177, %v194
    %v203 = vstv %s48
    %v204 = vmul.f32 %v203, %v69
    %v205 = vmul.f32 %v203, %v70
    %v206 = vmul.f32 %v203, %v71
    %v207 = vmul.f32 %v203, %v72
    %v212 = vrot.slane %v204, 1
    %v213 = vrot.slane %v205, 1
    %v214 = vsel %vm91, %v212, %v213
    %v215 = vrot.slane %v206, 1
    %v216 = vrot.slane %v207, 1
    %v217 = vsel %vm91, %v215, %v216
    %218 = vrot.lane.b32.xlu0 %v214, 127
    %v219 = vpop.permute.xlu0 %218
    %220 = vrot.lane.b32.xlu0 %v213, 127
    %v221 = vpop.permute.xlu0 %220
    %222 = vrot.lane.b32.xlu0 %v217, 127
    %v223 = vpop.permute.xlu0 %222
    %224 = vrot.lane.b32.xlu0 %v216, 127
    %v225 = vpop.permute.xlu0 %224
    %v230 = vadd.f32 %v199, %v219
    %v231 = vadd.f32 %v200, %v221
    %v232 = vadd.f32 %v201, %v223
    %v233 = vadd.f32 %v202, %v225
    %v234 = vstv %s53
    %v235 = vmul.f32 %v234, %v69
    %v236 = vmul.f32 %v234, %v70
    %v237 = vmul.f32 %v234, %v71
    %v238 = vmul.f32 %v234, %v72
    %v243 = vrot.slane %v235, 2
    %v244 = vrot.slane %v236, 2
    %v245 = vsel %vm115, %v243, %v244
    %v246 = vrot.slane %v237, 2
    %v247 = vrot.slane %v238, 2
    %v248 = vsel %vm115, %v246, %v247
    %249 = vrot.lane.b32.xlu0 %v245, 127
    %v250 = vpop.permute.xlu0 %249
    %251 = vrot.lane.b32.xlu0 %v244, 127
    %v252 = vpop.permute.xlu0 %251
    %253 = vrot.lane.b32.xlu0 %v248, 127
    %v254 = vpop.permute.xlu0 %253
    %255 = vrot.lane.b32.xlu0 %v247, 127
    %v256 = vpop.permute.xlu0 %255
    %v261 = vadd.f32 %v230, %v250
    %v262 = vadd.f32 %v231, %v252
    %v263 = vadd.f32 %v232, %v254
    %v264 = vadd.f32 %v233, %v256
    %v265 = vstv %s58
    %v266 = vmul.f32 %v265, %v69
    %v267 = vmul.f32 %v265, %v70
    %v268 = vmul.f32 %v265, %v71
    %v269 = vmul.f32 %v265, %v72
    %v274 = vrot.slane %v266, 3
    %v275 = vrot.slane %v267, 3
    %v276 = vsel %vm139, %v274, %v275
    %v277 = vrot.slane %v268, 3
    %v278 = vrot.slane %v269, 3
    %v279 = vsel %vm139, %v277, %v278
    %280 = vrot.lane.b32.xlu0 %v276, 127
    %v281 = vpop.permute.xlu0 %280
    %282 = vrot.lane.b32.xlu0 %v275, 127
    %v283 = vpop.permute.xlu0 %282
    %284 = vrot.lane.b32.xlu0 %v279, 127
    %v285 = vpop.permute.xlu0 %284
    %286 = vrot.lane.b32.xlu0 %v278, 127
    %v287 = vpop.permute.xlu0 %286
    %v292 = vadd.f32 %v261, %v281
    %v293 = vadd.f32 %v262, %v283
    %v294 = vadd.f32 %v263, %v285
    %v295 = vadd.f32 %v264, %v287
    %v296 = vstv %s63
    %v297 = vmul.f32 %v296, %v69
    %v298 = vmul.f32 %v296, %v70
    %v299 = vmul.f32 %v296, %v71
    %v300 = vmul.f32 %v296, %v72
    %v305 = vrot.slane %v297, 4
    %v306 = vrot.slane %v298, 4
    %v307 = vsel %vm163, %v305, %v306
    %v308 = vrot.slane %v299, 4
    %v309 = vrot.slane %v300, 4
    %v310 = vsel %vm163, %v308, %v309
    %311 = vrot.lane.b32.xlu0 %v307, 127
    %v312 = vpop.permute.xlu0 %311
    %313 = vrot.lane.b32.xlu0 %v306, 127
    %v314 = vpop.permute.xlu0 %313
    %315 = vrot.lane.b32.xlu0 %v310, 127
    %v316 = vpop.permute.xlu0 %315
    %317 = vrot.lane.b32.xlu0 %v309, 127
    %v318 = vpop.permute.xlu0 %317
    %v323 = vadd.f32 %v292, %v312
    %v324 = vadd.f32 %v293, %v314
    %v325 = vadd.f32 %v294, %v316
    %v326 = vadd.f32 %v295, %v318
    %v327 = vstv %s44
    %v328 = vmul.f32 %v327, %v69
    %v329 = vmul.f32 %v327, %v70
    %v330 = vmul.f32 %v327, %v71
    %v331 = vmul.f32 %v327, %v72
    %336 = vrot.lane.b32.xlu0 %v328, 126
    %v337 = vpop.permute.xlu0 %336
    %338 = vrot.lane.b32.xlu0 %v329, 126
    %v339 = vpop.permute.xlu0 %338
    %340 = vrot.lane.b32.xlu0 %v330, 126
    %v341 = vpop.permute.xlu0 %340
    %342 = vrot.lane.b32.xlu0 %v331, 126
    %v343 = vpop.permute.xlu0 %342
    %v348 = vadd.f32 %v323, %v337
    %v349 = vadd.f32 %v324, %v339
    %v350 = vadd.f32 %v325, %v341
    %v351 = vadd.f32 %v326, %v343
    %v352 = vstv %s49
    %v353 = vmul.f32 %v352, %v69
    %v354 = vmul.f32 %v352, %v70
    %v355 = vmul.f32 %v352, %v71
    %v356 = vmul.f32 %v352, %v72
    %v361 = vrot.slane %v353, 1
    %v362 = vrot.slane %v354, 1
    %v363 = vsel %vm91, %v361, %v362
    %v364 = vrot.slane %v355, 1
    %v365 = vrot.slane %v356, 1
    %v366 = vsel %vm91, %v364, %v365
    %367 = vrot.lane.b32.xlu0 %v363, 126
    %v368 = vpop.permute.xlu0 %367
    %369 = vrot.lane.b32.xlu0 %v362, 126
    %v370 = vpop.permute.xlu0 %369
    %371 = vrot.lane.b32.xlu0 %v366, 126
    %v372 = vpop.permute.xlu0 %371
    %373 = vrot.lane.b32.xlu0 %v365, 126
    %v374 = vpop.permute.xlu0 %373
    %v379 = vadd.f32 %v348, %v368
    %v380 = vadd.f32 %v349, %v370
    %v381 = vadd.f32 %v350, %v372
    %v382 = vadd.f32 %v351, %v374
    %v383 = vstv %s54
    %v384 = vmul.f32 %v383, %v69
    %v385 = vmul.f32 %v383, %v70
    %v386 = vmul.f32 %v383, %v71
    %v387 = vmul.f32 %v383, %v72
    %v392 = vrot.slane %v384, 2
    %v393 = vrot.slane %v385, 2
    %v394 = vsel %vm115, %v392, %v393
    %v395 = vrot.slane %v386, 2
    %v396 = vrot.slane %v387, 2
    %v397 = vsel %vm115, %v395, %v396
    %398 = vrot.lane.b32.xlu0 %v394, 126
    %v399 = vpop.permute.xlu0 %398
    %400 = vrot.lane.b32.xlu0 %v393, 126
    %v401 = vpop.permute.xlu0 %400
    %402 = vrot.lane.b32.xlu0 %v397, 126
    %v403 = vpop.permute.xlu0 %402
    %404 = vrot.lane.b32.xlu0 %v396, 126
    %v405 = vpop.permute.xlu0 %404
    %v410 = vadd.f32 %v379, %v399
    %v411 = vadd.f32 %v380, %v401
    %v412 = vadd.f32 %v381, %v403
    %v413 = vadd.f32 %v382, %v405
    %v414 = vstv %s59
    %v415 = vmul.f32 %v414, %v69
    %v416 = vmul.f32 %v414, %v70
    %v417 = vmul.f32 %v414, %v71
    %v418 = vmul.f32 %v414, %v72
    %v423 = vrot.slane %v415, 3
    %v424 = vrot.slane %v416, 3
    %v425 = vsel %vm139, %v423, %v424
    %v426 = vrot.slane %v417, 3
    %v427 = vrot.slane %v418, 3
    %v428 = vsel %vm139, %v426, %v427
    %429 = vrot.lane.b32.xlu0 %v425, 126
    %v430 = vpop.permute.xlu0 %429
    %431 = vrot.lane.b32.xlu0 %v424, 126
    %v432 = vpop.permute.xlu0 %431
    %433 = vrot.lane.b32.xlu0 %v428, 126
    %v434 = vpop.permute.xlu0 %433
    %435 = vrot.lane.b32.xlu0 %v427, 126
    %v436 = vpop.permute.xlu0 %435
    %v441 = vadd.f32 %v410, %v430
    %v442 = vadd.f32 %v411, %v432
    %v443 = vadd.f32 %v412, %v434
    %v444 = vadd.f32 %v413, %v436
    %v445 = vstv %s64
    %v446 = vmul.f32 %v445, %v69
    %v447 = vmul.f32 %v445, %v70
    %v448 = vmul.f32 %v445, %v71
    %v449 = vmul.f32 %v445, %v72
    %v454 = vrot.slane %v446, 4
    %v455 = vrot.slane %v447, 4
    %v456 = vsel %vm163, %v454, %v455
    %v457 = vrot.slane %v448, 4
    %v458 = vrot.slane %v449, 4
    %v459 = vsel %vm163, %v457, %v458
    %460 = vrot.lane.b32.xlu0 %v456, 126
    %v461 = vpop.permute.xlu0 %460
    %462 = vrot.lane.b32.xlu0 %v455, 126
    %v463 = vpop.permute.xlu0 %462
    %464 = vrot.lane.b32.xlu0 %v459, 126
    %v465 = vpop.permute.xlu0 %464
    %466 = vrot.lane.b32.xlu0 %v458, 126
    %v467 = vpop.permute.xlu0 %466
    %v472 = vadd.f32 %v441, %v461
    %v473 = vadd.f32 %v442, %v463
    %v474 = vadd.f32 %v443, %v465
    %v475 = vadd.f32 %v444, %v467
    %v476 = vstv %s45
    %v477 = vmul.f32 %v476, %v69
    %v478 = vmul.f32 %v476, %v70
    %v479 = vmul.f32 %v476, %v71
    %v480 = vmul.f32 %v476, %v72
    %485 = vrot.lane.b32.xlu0 %v477, 125
    %v486 = vpop.permute.xlu0 %485
    %487 = vrot.lane.b32.xlu0 %v478, 125
    %v488 = vpop.permute.xlu0 %487
    %489 = vrot.lane.b32.xlu0 %v479, 125
    %v490 = vpop.permute.xlu0 %489
    %491 = vrot.lane.b32.xlu0 %v480, 125
    %v492 = vpop.permute.xlu0 %491
    %v497 = vadd.f32 %v472, %v486
    %v498 = vadd.f32 %v473, %v488
    %v499 = vadd.f32 %v474, %v490
    %v500 = vadd.f32 %v475, %v492
    %v501 = vstv %s50
    %v502 = vmul.f32 %v501, %v69
    %v503 = vmul.f32 %v501, %v70
    %v504 = vmul.f32 %v501, %v71
    %v505 = vmul.f32 %v501, %v72
    %v510 = vrot.slane %v502, 1
    %v511 = vrot.slane %v503, 1
    %v512 = vsel %vm91, %v510, %v511
    %v513 = vrot.slane %v504, 1
    %v514 = vrot.slane %v505, 1
    %v515 = vsel %vm91, %v513, %v514
    %516 = vrot.lane.b32.xlu0 %v512, 125
    %v517 = vpop.permute.xlu0 %516
    %518 = vrot.lane.b32.xlu0 %v511, 125
    %v519 = vpop.permute.xlu0 %518
    %520 = vrot.lane.b32.xlu0 %v515, 125
    %v521 = vpop.permute.xlu0 %520
    %522 = vrot.lane.b32.xlu0 %v514, 125
    %v523 = vpop.permute.xlu0 %522
    %v528 = vadd.f32 %v497, %v517
    %v529 = vadd.f32 %v498, %v519
    %v530 = vadd.f32 %v499, %v521
    %v531 = vadd.f32 %v500, %v523
    %v532 = vstv %s55
    %v533 = vmul.f32 %v532, %v69
    %v534 = vmul.f32 %v532, %v70
    %v535 = vmul.f32 %v532, %v71
    %v536 = vmul.f32 %v532, %v72
    %v541 = vrot.slane %v533, 2
    %v542 = vrot.slane %v534, 2
    %v543 = vsel %vm115, %v541, %v542
    %v544 = vrot.slane %v535, 2
    %v545 = vrot.slane %v536, 2
    %v546 = vsel %vm115, %v544, %v545
    %547 = vrot.lane.b32.xlu0 %v543, 125
    %v548 = vpop.permute.xlu0 %547
    %549 = vrot.lane.b32.xlu0 %v542, 125
    %v550 = vpop.permute.xlu0 %549
    %551 = vrot.lane.b32.xlu0 %v546, 125
    %v552 = vpop.permute.xlu0 %551
    %553 = vrot.lane.b32.xlu0 %v545, 125
    %v554 = vpop.permute.xlu0 %553
    %v559 = vadd.f32 %v528, %v548
    %v560 = vadd.f32 %v529, %v550
    %v561 = vadd.f32 %v530, %v552
    %v562 = vadd.f32 %v531, %v554
    %v563 = vstv %s60
    %v564 = vmul.f32 %v563, %v69
    %v565 = vmul.f32 %v563, %v70
    %v566 = vmul.f32 %v563, %v71
    %v567 = vmul.f32 %v563, %v72
    %v572 = vrot.slane %v564, 3
    %v573 = vrot.slane %v565, 3
    %v574 = vsel %vm139, %v572, %v573
    %v575 = vrot.slane %v566, 3
    %v576 = vrot.slane %v567, 3
    %v577 = vsel %vm139, %v575, %v576
    %578 = vrot.lane.b32.xlu0 %v574, 125
    %v579 = vpop.permute.xlu0 %578
    %580 = vrot.lane.b32.xlu0 %v573, 125
    %v581 = vpop.permute.xlu0 %580
    %582 = vrot.lane.b32.xlu0 %v577, 125
    %v583 = vpop.permute.xlu0 %582
    %584 = vrot.lane.b32.xlu0 %v576, 125
    %v585 = vpop.permute.xlu0 %584
    %v590 = vadd.f32 %v559, %v579
    %v591 = vadd.f32 %v560, %v581
    %v592 = vadd.f32 %v561, %v583
    %v593 = vadd.f32 %v562, %v585
    %v594 = vstv %s65
    %v595 = vmul.f32 %v594, %v69
    %v596 = vmul.f32 %v594, %v70
    %v597 = vmul.f32 %v594, %v71
    %v598 = vmul.f32 %v594, %v72
    %v603 = vrot.slane %v595, 4
    %v604 = vrot.slane %v596, 4
    %v605 = vsel %vm163, %v603, %v604
    %v606 = vrot.slane %v597, 4
    %v607 = vrot.slane %v598, 4
    %v608 = vsel %vm163, %v606, %v607
    %609 = vrot.lane.b32.xlu0 %v605, 125
    %v610 = vpop.permute.xlu0 %609
    %611 = vrot.lane.b32.xlu0 %v604, 125
    %v612 = vpop.permute.xlu0 %611
    %613 = vrot.lane.b32.xlu0 %v608, 125
    %v614 = vpop.permute.xlu0 %613
    %615 = vrot.lane.b32.xlu0 %v607, 125
    %v616 = vpop.permute.xlu0 %615
    %v621 = vadd.f32 %v590, %v610
    %v622 = vadd.f32 %v591, %v612
    %v623 = vadd.f32 %v592, %v614
    %v624 = vadd.f32 %v593, %v616
    %v625 = vstv %s46
    %v626 = vmul.f32 %v625, %v69
    %v627 = vmul.f32 %v625, %v70
    %v628 = vmul.f32 %v625, %v71
    %v629 = vmul.f32 %v625, %v72
    %634 = vrot.lane.b32.xlu0 %v626, 124
    %v635 = vpop.permute.xlu0 %634
    %636 = vrot.lane.b32.xlu0 %v627, 124
    %v637 = vpop.permute.xlu0 %636
    %638 = vrot.lane.b32.xlu0 %v628, 124
    %v639 = vpop.permute.xlu0 %638
    %640 = vrot.lane.b32.xlu0 %v629, 124
    %v641 = vpop.permute.xlu0 %640
    %v646 = vadd.f32 %v621, %v635
    %v647 = vadd.f32 %v622, %v637
    %v648 = vadd.f32 %v623, %v639
    %v649 = vadd.f32 %v624, %v641
    %v650 = vstv %s51
    %v651 = vmul.f32 %v650, %v69
    %v652 = vmul.f32 %v650, %v70
    %v653 = vmul.f32 %v650, %v71
    %v654 = vmul.f32 %v650, %v72
    %v659 = vrot.slane %v651, 1
    %v660 = vrot.slane %v652, 1
    %v661 = vsel %vm91, %v659, %v660
    %v662 = vrot.slane %v653, 1
    %v663 = vrot.slane %v654, 1
    %v664 = vsel %vm91, %v662, %v663
    %665 = vrot.lane.b32.xlu0 %v661, 124
    %v666 = vpop.permute.xlu0 %665
    %667 = vrot.lane.b32.xlu0 %v660, 124
    %v668 = vpop.permute.xlu0 %667
    %669 = vrot.lane.b32.xlu0 %v664, 124
    %v670 = vpop.permute.xlu0 %669
    %671 = vrot.lane.b32.xlu0 %v663, 124
    %v672 = vpop.permute.xlu0 %671
    %v677 = vadd.f32 %v646, %v666
    %v678 = vadd.f32 %v647, %v668
    %v679 = vadd.f32 %v648, %v670
    %v680 = vadd.f32 %v649, %v672
    %v681 = vstv %s56
    %v682 = vmul.f32 %v681, %v69
    %v683 = vmul.f32 %v681, %v70
    %v684 = vmul.f32 %v681, %v71
    %v685 = vmul.f32 %v681, %v72
    %v690 = vrot.slane %v682, 2
    %v691 = vrot.slane %v683, 2
    %v692 = vsel %vm115, %v690, %v691
    %v693 = vrot.slane %v684, 2
    %v694 = vrot.slane %v685, 2
    %v695 = vsel %vm115, %v693, %v694
    %696 = vrot.lane.b32.xlu0 %v692, 124
    %v697 = vpop.permute.xlu0 %696
    %698 = vrot.lane.b32.xlu0 %v691, 124
    %v699 = vpop.permute.xlu0 %698
    %700 = vrot.lane.b32.xlu0 %v695, 124
    %v701 = vpop.permute.xlu0 %700
    %702 = vrot.lane.b32.xlu0 %v694, 124
    %v703 = vpop.permute.xlu0 %702
    %v708 = vadd.f32 %v677, %v697
    %v709 = vadd.f32 %v678, %v699
    %v710 = vadd.f32 %v679, %v701
    %v711 = vadd.f32 %v680, %v703
    %v712 = vstv %s61
    %v713 = vmul.f32 %v712, %v69
    %v714 = vmul.f32 %v712, %v70
    %v715 = vmul.f32 %v712, %v71
    %v716 = vmul.f32 %v712, %v72
    %v721 = vrot.slane %v713, 3
    %v722 = vrot.slane %v714, 3
    %v723 = vsel %vm139, %v721, %v722
    %v724 = vrot.slane %v715, 3
    %v725 = vrot.slane %v716, 3
    %v726 = vsel %vm139, %v724, %v725
    %727 = vrot.lane.b32.xlu0 %v723, 124
    %v728 = vpop.permute.xlu0 %727
    %729 = vrot.lane.b32.xlu0 %v722, 124
    %v730 = vpop.permute.xlu0 %729
    %731 = vrot.lane.b32.xlu0 %v726, 124
    %v732 = vpop.permute.xlu0 %731
    %733 = vrot.lane.b32.xlu0 %v725, 124
    %v734 = vpop.permute.xlu0 %733
    %v739 = vadd.f32 %v708, %v728
    %v740 = vadd.f32 %v709, %v730
    %v741 = vadd.f32 %v710, %v732
    %v742 = vadd.f32 %v711, %v734
    %v743 = vstv %s66
    %v744 = vmul.f32 %v743, %v69
    %v745 = vmul.f32 %v743, %v70
    %v746 = vmul.f32 %v743, %v71
    %v747 = vmul.f32 %v743, %v72
    %v752 = vrot.slane %v744, 4
    %v753 = vrot.slane %v745, 4
    %v754 = vsel %vm163, %v752, %v753
    %v755 = vrot.slane %v746, 4
    %v756 = vrot.slane %v747, 4
    %v757 = vsel %vm163, %v755, %v756
    %758 = vrot.lane.b32.xlu0 %v754, 124
    %v759 = vpop.permute.xlu0 %758
    %760 = vrot.lane.b32.xlu0 %v753, 124
    %v761 = vpop.permute.xlu0 %760
    %762 = vrot.lane.b32.xlu0 %v757, 124
    %v763 = vpop.permute.xlu0 %762
    %764 = vrot.lane.b32.xlu0 %v756, 124
    %v765 = vpop.permute.xlu0 %764
    %v770 = vadd.f32 %v739, %v759
    %v771 = vadd.f32 %v740, %v761
    %v772 = vadd.f32 %v741, %v763
    %v773 = vadd.f32 %v742, %v765
    %vm774 = vcmask 97280
    %775 = vst.msk [vmem:[%s3] sm:$0xff] %vm774, %v770
    %vm776 = vcmask 93184
    %777 = vst.msk [vmem:[%s3 + $0x8] sm:$0xf] %vm776, %v771
    %778 = vst.msk [vmem:[%s3 + $0x10] sm:$0xff] %vm774, %v772
    %779 = vst.msk [vmem:[%s3 + $0x18] sm:$0xf] %vm776, %v773
    // Predicated region
    $region22: #{tpu_custom_call.1} parent=1 // pred_check
      _
    $region23: #{tpu_custom_call.1} parent=1 // pred_check_branch
      %781 = sbr.rel (0) target = $region25
    $region24: #{tpu_custom_call.1} parent=1 // pred_region
      _
    $region25: #{tpu_custom_call.1} parent=1 // pred_fallthru
      _
    // Predicated region
    $region26: #{tpu_custom_call.1} parent=1 // pred_check
      _
    $region27: #{tpu_custom_call.1} parent=1 // pred_check_branch
      %783 = sbr.rel (0) target = $region29
    $region28: #{tpu_custom_call.1} parent=1 // pred_region
      _
    $region29: #{tpu_custom_call.1} parent=1 // pred_fallthru
      _
    %784 = vsyncpa [#allocation4], 1
    %785 = vsyncpa [#allocation5], 1

</llo_original>
